<compile_context>
chip_gen: v5e
topology: v5e:2x2
jax: 0.10.0
libtpu: 0.0.40
codegen_flags: <defaults>
</compile_context>

<pallas_src>
import jax
import jax.numpy as jnp
from jax.experimental import pallas as pl
from jax.experimental.pallas import tpu as pltpu


def _masked_gap_kernel(x_ref, o_ref, acc_ref):
    """Grid: (batch tiles [parallel], sequence tiles [arbitrary])."""
    si = pl.program_id(1)

    @pl.when(si == 0)
    def _init():
        acc_ref[...] = jnp.zeros_like(acc_ref)

    # Partial sum over this sequence tile, accumulated in f32.
    x = x_ref[...].astype(jnp.float32)          # (BT, TS, H)
    acc_ref[...] += jnp.sum(x, axis=1)          # (BT, H)

    @pl.when(si == pl.num_programs(1) - 1)
    def _finalize():
        s = acc_ref[...]                                 # (BT, H)
        denom = jnp.sum(s, axis=1, keepdims=True)        # (BT, 1)
        denom = jnp.maximum(denom, 1.0)                  # clamp(min=1)
        inv = 1.0 / denom                                # one divide per row
        o_ref[...] = (s * inv).astype(o_ref.dtype)


def _pick_blocks(B, S, H, itemsize):
    """Choose (BT, TS) tile sizes that respect sublane granularity and VMEM."""
    # Sublane granularity: 8 for 4-byte, 16 for 2-byte, 32 for 1-byte dtypes.
    sub = max(8, 32 // itemsize)
    # Batch tile: full B if small, else a multiple of `sub` (capped at 64 rows)
    # so the output stores are full, unmasked vregs.
    if B <= sub:
        bt = B
    else:
        bt = min((B // sub) * sub, 64)
    # Sequence tile: largest multiple of `sub` (or all of S) keeping one input
    # block <= ~12 MiB; double-buffered (~24 MiB) this fits even v7x's 64 MiB.
    budget = 12 * 1024 * 1024
    row_bytes = max(bt * H * itemsize, 1)
    max_ts = max(1, budget // row_bytes)
    if S <= max_ts:
        ts = S
    else:
        ts = max(sub, (max_ts // sub) * sub)
        # If even one `sub`-deep slab blows the budget, shrink the batch tile
        # (keeping it a multiple of `sub`).
        while bt > sub and bt * ts * H * itemsize > budget:
            bt = max(sub, (bt // 2 // sub) * sub)
    return bt, ts


def masked_global_avg_pool1d(x, mask=None, *, block_b=None, block_s=None):
    """x: (B, S, H), mask: (B, S) [unused, as in the reference] -> (B, H)."""
    del mask  # Intentionally unused: the PyTorch forward never reads it.
    B, S, H = x.shape
    itemsize = jnp.dtype(x.dtype).itemsize
    bt_auto, ts_auto = _pick_blocks(B, S, H, itemsize)
    bt = block_b if block_b is not None else bt_auto
    ts = block_s if block_s is not None else ts_auto

    # Pad so the grid tiles evenly. Zero-padding the sequence axis adds 0 to
    # the sums (exact); padded batch rows are sliced off after the call.
    Bp = pl.cdiv(B, bt) * bt
    Sp = pl.cdiv(S, ts) * ts
    if (Bp, Sp) != (B, S):
        x = jnp.pad(x, ((0, Bp - B), (0, Sp - S), (0, 0)))

    out = pl.pallas_call(
        _masked_gap_kernel,
        out_shape=jax.ShapeDtypeStruct((Bp, H), x.dtype),
        grid_spec=pltpu.PrefetchScalarGridSpec(
            num_scalar_prefetch=0,
            grid=(Bp // bt, Sp // ts),
            in_specs=[pl.BlockSpec((bt, ts, H), lambda b, s: (b, s, 0))],
            out_specs=pl.BlockSpec((bt, H), lambda b, s: (b, 0)),
            scratch_shapes=[pltpu.VMEM((bt, H), jnp.float32)],
        ),
        compiler_params=pltpu.CompilerParams(
            dimension_semantics=("parallel", "arbitrary"),
            vmem_limit_bytes=48 * 1024 * 1024,
        ),
    )(x)
    return out[:B]


def masked_global_avg_pool1d_ref(x, mask=None):
    # Pure-JAX reference mirroring the PyTorch forward (mask unused).
    s = jnp.sum(x.astype(jnp.float32), axis=1)
    denom = jnp.maximum(jnp.sum(s, axis=1, keepdims=True), 1.0)
    return (s / denom).astype(x.dtype)


if __name__ == "__main__":
    key = jax.random.PRNGKey(0)

    def check(B, S, H, dtype, **kw):
        kx, km = jax.random.split(jax.random.fold_in(key, B * 1000 + S))
        x = jax.random.normal(kx, (B, S, H), dtype=jnp.float32).astype(dtype)
        # mask: 1.0 for real chunks, 0.0 for padded chunks (unused by forward,
        # exactly like the reference module).
        mask = (jax.random.uniform(km, (B, S)) > 0.3).astype(dtype)
        out = jax.block_until_ready(masked_global_avg_pool1d(x, mask, **kw))
        ref = masked_global_avg_pool1d_ref(x, mask)
        assert out.shape == (B, H), out.shape
        tol = 1e-5 if dtype == jnp.float32 else 2e-2
        assert jnp.allclose(out.astype(jnp.float32), ref.astype(jnp.float32),
                            atol=tol, rtol=tol), f"mismatch B={B} S={S} H={H} {dtype}"

    # Auto-tiled, evenly divisible shapes.
    check(16, 32, 128, jnp.float32)
    # Forced small tiles: multi-step accumulation over S + batch-padding path.
    check(10, 24, 128, jnp.float32, block_b=8, block_s=8)
    # bf16 input (sublane granularity 16) with f32 accumulation in the kernel.
    check(4, 16, 128, jnp.bfloat16)

    print("KERNEL_OK")
</pallas_src>

<mosaic_0001>
module attributes {stable_mosaic.version = 11 : i64} {
  func.func @_masked_gap_kernel(%arg0: i32, %arg1: i32, %arg2: memref<16x32x128xf32, #tpu.memory_space<vmem>>, %arg3: memref<16x128xf32, #tpu.memory_space<vmem>>, %arg4: memref<16x128xf32, #tpu.memory_space<vmem>>) attributes {dimension_semantics = [#tpu.dimension_semantics<parallel>, #tpu.dimension_semantics<arbitrary>], iteration_bounds = array<i64: 1, 1>, scalar_prefetch = 0 : i64, scratch_operands = 1 : i64, tpu.core_type = #tpu.core_type<tc>, window_params = [{transform_indices = @transform_0, window_bounds = array<i64: 16, 32, 128>}, {transform_indices = @transform_1, window_bounds = array<i64: 16, 128>}]} {
    %c0_i32 = arith.constant 0 : i32
    %0 = arith.cmpi eq, %arg1, %c0_i32 : i32
    %1 = arith.extui %0 : i1 to i32
    %c0_i32_0 = arith.constant 0 : i32
    %2 = arith.cmpi ne, %1, %c0_i32_0 : i32
    scf.if %2 {
      %cst_9 = arith.constant 0.000000e+00 : f32
      %11 = vector.broadcast %cst_9 : f32 to vector<16x128xf32>
      %c0_10 = arith.constant 0 : index
      %c0_11 = arith.constant 0 : index
      %12 = vector.load %arg4[%c0_10, %c0_11] : memref<16x128xf32, #tpu.memory_space<vmem>>, vector<16x128xf32>
      tpu.vector_store %arg4[%c0_10, %c0_11], %11 {strides = array<i32>} : memref<16x128xf32, #tpu.memory_space<vmem>>, vector<16x128xf32>,
    } else {
    }
    %c0 = arith.constant 0 : index
    %c0_1 = arith.constant 0 : index
    %c0_2 = arith.constant 0 : index
    %3 = vector.load %arg2[%c0, %c0_1, %c0_2] : memref<16x32x128xf32, #tpu.memory_space<vmem>>, vector<16x32x128xf32>
    %c0_3 = arith.constant 0 : index
    %c0_4 = arith.constant 0 : index
    %4 = vector.load %arg4[%c0_3, %c0_4] : memref<16x128xf32, #tpu.memory_space<vmem>>, vector<16x128xf32>
    %cst = arith.constant dense<0.000000e+00> : vector<16x128xf32>
    %5 = vector.multi_reduction <add>, %3, %cst [1] : vector<16x32x128xf32> to vector<16x128xf32>
    %6 = arith.addf %4, %5 : vector<16x128xf32>
    %c0_5 = arith.constant 0 : index
    %c0_6 = arith.constant 0 : index
    %7 = vector.load %arg4[%c0_5, %c0_6] : memref<16x128xf32, #tpu.memory_space<vmem>>, vector<16x128xf32>
    tpu.vector_store %arg4[%c0_5, %c0_6], %6 {strides = array<i32>} : memref<16x128xf32, #tpu.memory_space<vmem>>, vector<16x128xf32>,
    %c0_i32_7 = arith.constant 0 : i32
    %8 = arith.cmpi eq, %arg1, %c0_i32_7 : i32
    %9 = arith.extui %8 : i1 to i32
    %c0_i32_8 = arith.constant 0 : i32
    %10 = arith.cmpi ne, %9, %c0_i32_8 : i32
    scf.if %10 {
      %c0_9 = arith.constant 0 : index
      %c0_10 = arith.constant 0 : index
      %11 = vector.load %arg4[%c0_9, %c0_10] : memref<16x128xf32, #tpu.memory_space<vmem>>, vector<16x128xf32>
      %cst_11 = arith.constant dense<0.000000e+00> : vector<16xf32>
      %12 = vector.multi_reduction <add>, %11, %cst_11 [1] : vector<16x128xf32> to vector<16xf32>
      %13 = vector.shape_cast %12 : vector<16xf32> to vector<16x1xf32>
      %cst_12 = arith.constant 1.000000e+00 : f32
      %14 = vector.broadcast %cst_12 : f32 to vector<16x1xf32>
      %15 = arith.maximumf %13, %14 : vector<16x1xf32>
      %cst_13 = arith.constant 1.000000e+00 : f32
      %16 = vector.broadcast %cst_13 : f32 to vector<16x1xf32>
      %17 = arith.divf %16, %15 : vector<16x1xf32>
      %18 = vector.broadcast %17 : vector<16x1xf32> to vector<16x128xf32>
      %19 = arith.mulf %11, %18 : vector<16x128xf32>
      %c0_14 = arith.constant 0 : index
      %c0_15 = arith.constant 0 : index
      %20 = vector.load %arg3[%c0_14, %c0_15] : memref<16x128xf32, #tpu.memory_space<vmem>>, vector<16x128xf32>
      tpu.vector_store %arg3[%c0_14, %c0_15], %19 {strides = array<i32>} : memref<16x128xf32, #tpu.memory_space<vmem>>, vector<16x128xf32>,
    } else {
    }
    return
  }
  func.func @transform_0(%arg0: i32, %arg1: i32) -> (i32, i32, i32) {
    %c0_i32 = arith.constant 0 : i32
    %c0_i32_0 = arith.constant 0 : i32
    return %arg0, %arg1, %c0_i32 : i32, i32, i32
  }
  func.func @transform_1(%arg0: i32, %arg1: i32) -> (i32, i32) {
    %c0_i32 = arith.constant 0 : i32
    %c0_i32_0 = arith.constant 0 : i32
    return %arg0, %c0_i32 : i32, i32
  }
}

</mosaic_0001>

<llo_original>
// kernel: tpu_custom_call.1
$region0: #{tpu_custom_call.1}
  #allocation0 [shape = 'u32[]', space=smem, size = 0x4, offset = 0x4, fixed_abs, tag = 'smem constant byte address 0x4 - core index']
  #allocation1 [shape = 'u32[72,128]{1,0:T(1,128)}', space=vmem, size = 0x9000, scoped, tag = 'internal scratch']
  #allocation2 [shape = 'f32[16,128]{1,0:T(8,128)}', space=vmem, size = 0x2000, scoped, tag = 'scratch operand']
  %s0 = inlined_call_operand.hbm [shape: f32[16,32,128], index: 0, kind: input, shape index: {}]
  %s1 = inlined_call_operand.hbm [shape: f32[16,128], index: 1, kind: output, shape index: {}]
  %s2 = sld [smem:[#allocation0]]
  $region26: #{tpu_custom_call.1} parent=0
    _
  %s4 = ssub.s32 1, %s2
  %s5 = scalar_select 0, %s4, %s2
  $region1: #{tpu_custom_call.1} parent=0
    #allocation3 [shape = 'u8[262144]{0}', space=vmem, size = 0x40000, scoped, tag = 'input window, operand 0, single buffered']
    #allocation4 [shape = 's32[1]{0}', space=sflag, size = 0x4, scoped, tag = 'scoped memory for tpu_custom_call.1']
    #allocation5 [shape = 's32[1]{0}', space=sflag, size = 0x4, scoped, tag = 'scoped memory for tpu_custom_call.1']
    #allocation6 [shape = 'u8[8192]{0}', space=vmem, size = 0x2000, scoped, tag = 'output window, operand 0, single buffered']
    %6 = vsyncpa [#allocation4], 0
    %7 = vsyncpa [#allocation5], 0
    // Predicated region
    $region2: #{tpu_custom_call.1} parent=1 // pred_check
      _
    $region3: #{tpu_custom_call.1} parent=1 // pred_check_branch
      %9 = sbr.rel (0) target = $region5
    $region4: #{tpu_custom_call.1} parent=1 // pred_region
      %11 = vsyncadd [#allocation4], 0
      %s12 = sshll.u32 %s0, 4
      %s13 = int_to_ptr.hbm [resolvable:$true] %s12
      %s14 = sshll.u32 [#allocation3], 4
      %s15 = int_to_ptr.vmem [resolvable:$true] %s14
      %20 = dma.hbm_to_vmem [thread:$0]  %s13, 8192, %s15, [#allocation4], 128, 128, 8
    $region5: #{tpu_custom_call.1} parent=1 // pred_fallthru
      _
    // Predicated region
    $region6: #{tpu_custom_call.1} parent=1 // pred_check
      _
    $region7: #{tpu_custom_call.1} parent=1 // pred_check_branch
      %22 = sbr.rel (0) target = $region9
    $region8: #{tpu_custom_call.1} parent=1 // pred_region
      %24 = dma.done [#allocation4], 8192
    $region9: #{tpu_custom_call.1} parent=1 // pred_fallthru
      _
    %p25 = scmp.eq.s32.totalorder 0, 0
    // Predicated region
    $region10: #{tpu_custom_call.1} parent=1 // pred_check
      %p26 = pneg %p25
    $region11: #{tpu_custom_call.1} parent=1 // pred_check_branch
      %28 = sbr.rel (%p26) target = $region13
    $region12: #{tpu_custom_call.1} parent=1 // pred_region
      %29 = vst [vmem:[#allocation2] sm:$0xff] 0.0
      %30 = vst [vmem:[#allocation2 + $0x8] sm:$0xff] 0.0
    $region13: #{tpu_custom_call.1} parent=1 // pred_fallthru
      _
    %v31 = vld [vmem:[#allocation3] sm:$0xff]
    %v32 = vld [vmem:[#allocation3 + $0x8] sm:$0xff]
    %v33 = vld [vmem:[#allocation3 + $0x10] sm:$0xff]
    %v34 = vld [vmem:[#allocation3 + $0x18] sm:$0xff]
    %v35 = vld [vmem:[#allocation3 + $0x20] sm:$0xff]
    %v36 = vld [vmem:[#allocation3 + $0x28] sm:$0xff]
    %v37 = vld [vmem:[#allocation3 + $0x30] sm:$0xff]
    %v38 = vld [vmem:[#allocation3 + $0x38] sm:$0xff]
    %v39 = vld [vmem:[#allocation3 + $0x40] sm:$0xff]
    %v40 = vld [vmem:[#allocation3 + $0x48] sm:$0xff]
    %v41 = vld [vmem:[#allocation3 + $0x50] sm:$0xff]
    %v42 = vld [vmem:[#allocation3 + $0x58] sm:$0xff]
    %v43 = vld [vmem:[#allocation3 + $0x60] sm:$0xff]
    %v44 = vld [vmem:[#allocation3 + $0x68] sm:$0xff]
    %v45 = vld [vmem:[#allocation3 + $0x70] sm:$0xff]
    %v46 = vld [vmem:[#allocation3 + $0x78] sm:$0xff]
    %v47 = vld [vmem:[#allocation3 + $0x80] sm:$0xff]
    %v48 = vld [vmem:[#allocation3 + $0x88] sm:$0xff]
    %v49 = vld [vmem:[#allocation3 + $0x90] sm:$0xff]
    %v50 = vld [vmem:[#allocation3 + $0x98] sm:$0xff]
    %v51 = vld [vmem:[#allocation3 + $0xa0] sm:$0xff]
    %v52 = vld [vmem:[#allocation3 + $0xa8] sm:$0xff]
    %v53 = vld [vmem:[#allocation3 + $0xb0] sm:$0xff]
    %v54 = vld [vmem:[#allocation3 + $0xb8] sm:$0xff]
    %v55 = vld [vmem:[#allocation3 + $0xc0] sm:$0xff]
    %v56 = vld [vmem:[#allocation3 + $0xc8] sm:$0xff]
    %v57 = vld [vmem:[#allocation3 + $0xd0] sm:$0xff]
    %v58 = vld [vmem:[#allocation3 + $0xd8] sm:$0xff]
    %v59 = vld [vmem:[#allocation3 + $0xe0] sm:$0xff]
    %v60 = vld [vmem:[#allocation3 + $0xe8] sm:$0xff]
    %v61 = vld [vmem:[#allocation3 + $0xf0] sm:$0xff]
    %v62 = vld [vmem:[#allocation3 + $0xf8] sm:$0xff]
    %v63 = vld [vmem:[#allocation3 + $0x100] sm:$0xff]
    %v64 = vld [vmem:[#allocation3 + $0x108] sm:$0xff]
    %v65 = vld [vmem:[#allocation3 + $0x110] sm:$0xff]
    %v66 = vld [vmem:[#allocation3 + $0x118] sm:$0xff]
    %v67 = vld [vmem:[#allocation3 + $0x120] sm:$0xff]
    %v68 = vld [vmem:[#allocation3 + $0x128] sm:$0xff]
    %v69 = vld [vmem:[#allocation3 + $0x130] sm:$0xff]
    %v70 = vld [vmem:[#allocation3 + $0x138] sm:$0xff]
    %v71 = vld [vmem:[#allocation3 + $0x140] sm:$0xff]
    %v72 = vld [vmem:[#allocation3 + $0x148] sm:$0xff]
    %v73 = vld [vmem:[#allocation3 + $0x150] sm:$0xff]
    %v74 = vld [vmem:[#allocation3 + $0x158] sm:$0xff]
    %v75 = vld [vmem:[#allocation3 + $0x160] sm:$0xff]
    %v76 = vld [vmem:[#allocation3 + $0x168] sm:$0xff]
    %v77 = vld [vmem:[#allocation3 + $0x170] sm:$0xff]
    %v78 = vld [vmem:[#allocation3 + $0x178] sm:$0xff]
    %v79 = vld [vmem:[#allocation3 + $0x180] sm:$0xff]
    %v80 = vld [vmem:[#allocation3 + $0x188] sm:$0xff]
    %v81 = vld [vmem:[#allocation3 + $0x190] sm:$0xff]
    %v82 = vld [vmem:[#allocation3 + $0x198] sm:$0xff]
    %v83 = vld [vmem:[#allocation3 + $0x1a0] sm:$0xff]
    %v84 = vld [vmem:[#allocation3 + $0x1a8] sm:$0xff]
    %v85 = vld [vmem:[#allocation3 + $0x1b0] sm:$0xff]
    %v86 = vld [vmem:[#allocation3 + $0x1b8] sm:$0xff]
    %v87 = vld [vmem:[#allocation3 + $0x1c0] sm:$0xff]
    %v88 = vld [vmem:[#allocation3 + $0x1c8] sm:$0xff]
    %v89 = vld [vmem:[#allocation3 + $0x1d0] sm:$0xff]
    %v90 = vld [vmem:[#allocation3 + $0x1d8] sm:$0xff]
    %v91 = vld [vmem:[#allocation3 + $0x1e0] sm:$0xff]
    %v92 = vld [vmem:[#allocation3 + $0x1e8] sm:$0xff]
    %v93 = vld [vmem:[#allocation3 + $0x1f0] sm:$0xff]
    %v94 = vld [vmem:[#allocation3 + $0x1f8] sm:$0xff]
    %v95 = vld [vmem:[#allocation2] sm:$0xff]
    %v96 = vld [vmem:[#allocation2 + $0x8] sm:$0xff]
    %v97 = vadd.f32 %v31, %v32
    %v98 = vadd.f32 %v97, %v33
    %v99 = vadd.f32 %v98, %v34
    %v100 = vrot.slane %v99, 4
    %v101 = vadd.f32 %v99, %v100
    %v102 = vrot.slane %v101, 2
    %v103 = vadd.f32 %v101, %v102
    %v104 = vrot.slane %v103, 1
    %v105 = vadd.f32 %v103, %v104
    %v106 = vadd.f32 %v35, %v36
    %v107 = vadd.f32 %v106, %v37
    %v108 = vadd.f32 %v107, %v38
    %v109 = vrot.slane %v108, 4
    %v110 = vadd.f32 %v108, %v109
    %v111 = vrot.slane %v110, 2
    %v112 = vadd.f32 %v110, %v111
    %v113 = vrot.slane %v112, 1
    %v114 = vadd.f32 %v112, %v113
    %v115 = vadd.f32 %v39, %v40
    %v116 = vadd.f32 %v115, %v41
    %v117 = vadd.f32 %v116, %v42
    %v118 = vrot.slane %v117, 4
    %v119 = vadd.f32 %v117, %v118
    %v120 = vrot.slane %v119, 2
    %v121 = vadd.f32 %v119, %v120
    %v122 = vrot.slane %v121, 1
    %v123 = vadd.f32 %v121, %v122
    %v124 = vadd.f32 %v43, %v44
    %v125 = vadd.f32 %v124, %v45
    %v126 = vadd.f32 %v125, %v46
    %v127 = vrot.slane %v126, 4
    %v128 = vadd.f32 %v126, %v127
    %v129 = vrot.slane %v128, 2
    %v130 = vadd.f32 %v128, %v129
    %v131 = vrot.slane %v130, 1
    %v132 = vadd.f32 %v130, %v131
    %v133 = vadd.f32 %v47, %v48
    %v134 = vadd.f32 %v133, %v49
    %v135 = vadd.f32 %v134, %v50
    %v136 = vrot.slane %v135, 4
    %v137 = vadd.f32 %v135, %v136
    %v138 = vrot.slane %v137, 2
    %v139 = vadd.f32 %v137, %v138
    %v140 = vrot.slane %v139, 1
    %v141 = vadd.f32 %v139, %v140
    %v142 = vadd.f32 %v51, %v52
    %v143 = vadd.f32 %v142, %v53
    %v144 = vadd.f32 %v143, %v54
    %v145 = vrot.slane %v144, 4
    %v146 = vadd.f32 %v144, %v145
    %v147 = vrot.slane %v146, 2
    %v148 = vadd.f32 %v146, %v147
    %v149 = vrot.slane %v148, 1
    %v150 = vadd.f32 %v148, %v149
    %v151 = vadd.f32 %v55, %v56
    %v152 = vadd.f32 %v151, %v57
    %v153 = vadd.f32 %v152, %v58
    %v154 = vrot.slane %v153, 4
    %v155 = vadd.f32 %v153, %v154
    %v156 = vrot.slane %v155, 2
    %v157 = vadd.f32 %v155, %v156
    %v158 = vrot.slane %v157, 1
    %v159 = vadd.f32 %v157, %v158
    %v160 = vadd.f32 %v59, %v60
    %v161 = vadd.f32 %v160, %v61
    %v162 = vadd.f32 %v161, %v62
    %v163 = vrot.slane %v162, 4
    %v164 = vadd.f32 %v162, %v163
    %v165 = vrot.slane %v164, 2
    %v166 = vadd.f32 %v164, %v165
    %v167 = vrot.slane %v166, 1
    %v168 = vadd.f32 %v166, %v167
    %v169 = vadd.f32 %v63, %v64
    %v170 = vadd.f32 %v169, %v65
    %v171 = vadd.f32 %v170, %v66
    %v172 = vrot.slane %v171, 4
    %v173 = vadd.f32 %v171, %v172
    %v174 = vrot.slane %v173, 2
    %v175 = vadd.f32 %v173, %v174
    %v176 = vrot.slane %v175, 1
    %v177 = vadd.f32 %v175, %v176
    %v178 = vadd.f32 %v67, %v68
    %v179 = vadd.f32 %v178, %v69
    %v180 = vadd.f32 %v179, %v70
    %v181 = vrot.slane %v180, 4
    %v182 = vadd.f32 %v180, %v181
    %v183 = vrot.slane %v182, 2
    %v184 = vadd.f32 %v182, %v183
    %v185 = vrot.slane %v184, 1
    %v186 = vadd.f32 %v184, %v185
    %v187 = vadd.f32 %v71, %v72
    %v188 = vadd.f32 %v187, %v73
    %v189 = vadd.f32 %v188, %v74
    %v190 = vrot.slane %v189, 4
    %v191 = vadd.f32 %v189, %v190
    %v192 = vrot.slane %v191, 2
    %v193 = vadd.f32 %v191, %v192
    %v194 = vrot.slane %v193, 1
    %v195 = vadd.f32 %v193, %v194
    %v196 = vadd.f32 %v75, %v76
    %v197 = vadd.f32 %v196, %v77
    %v198 = vadd.f32 %v197, %v78
    %v199 = vrot.slane %v198, 4
    %v200 = vadd.f32 %v198, %v199
    %v201 = vrot.slane %v200, 2
    %v202 = vadd.f32 %v200, %v201
    %v203 = vrot.slane %v202, 1
    %v204 = vadd.f32 %v202, %v203
    %v205 = vadd.f32 %v79, %v80
    %v206 = vadd.f32 %v205, %v81
    %v207 = vadd.f32 %v206, %v82
    %v208 = vrot.slane %v207, 4
    %v209 = vadd.f32 %v207, %v208
    %v210 = vrot.slane %v209, 2
    %v211 = vadd.f32 %v209, %v210
    %v212 = vrot.slane %v211, 1
    %v213 = vadd.f32 %v211, %v212
    %v214 = vadd.f32 %v83, %v84
    %v215 = vadd.f32 %v214, %v85
    %v216 = vadd.f32 %v215, %v86
    %v217 = vrot.slane %v216, 4
    %v218 = vadd.f32 %v216, %v217
    %v219 = vrot.slane %v218, 2
    %v220 = vadd.f32 %v218, %v219
    %v221 = vrot.slane %v220, 1
    %v222 = vadd.f32 %v220, %v221
    %v223 = vadd.f32 %v87, %v88
    %v224 = vadd.f32 %v223, %v89
    %v225 = vadd.f32 %v224, %v90
    %v226 = vrot.slane %v225, 4
    %v227 = vadd.f32 %v225, %v226
    %v228 = vrot.slane %v227, 2
    %v229 = vadd.f32 %v227, %v228
    %v230 = vrot.slane %v229, 1
    %v231 = vadd.f32 %v229, %v230
    %v232 = vadd.f32 %v91, %v92
    %v233 = vadd.f32 %v232, %v93
    %v234 = vadd.f32 %v233, %v94
    %v235 = vrot.slane %v234, 4
    %v236 = vadd.f32 %v234, %v235
    %v237 = vrot.slane %v236, 2
    %v238 = vadd.f32 %v236, %v237
    %v239 = vrot.slane %v238, 1
    %v240 = vadd.f32 %v238, %v239
    %vm257 = vcmask 1041409
    %v258 = vsel %vm257, %v114, %v105
    %vm259 = vcmask 1042434
    %v260 = vsel %vm259, %v123, %v258
    %vm261 = vcmask 1043459
    %v262 = vsel %vm261, %v132, %v260
    %vm263 = vcmask 1044484
    %v264 = vsel %vm263, %v141, %v262
    %vm265 = vcmask 1045509
    %v266 = vsel %vm265, %v150, %v264
    %vm267 = vcmask 1046534
    %v268 = vsel %vm267, %v159, %v266
    %vm269 = vcmask 1047559
    %v270 = vsel %vm269, %v168, %v268
    %v271 = vsel %vm257, %v186, %v177
    %v272 = vsel %vm259, %v195, %v271
    %v273 = vsel %vm261, %v204, %v272
    %v274 = vsel %vm263, %v213, %v273
    %v275 = vsel %vm265, %v222, %v274
    %v276 = vsel %vm267, %v231, %v275
    %v277 = vsel %vm269, %v240, %v276
    %v280 = vadd.f32 %v95, %v270
    %v281 = vadd.f32 %v96, %v277
    %282 = vst [vmem:[#allocation2] sm:$0xff] %v280
    %283 = vst [vmem:[#allocation2 + $0x8] sm:$0xff] %v281
    // Predicated region
    $region14: #{tpu_custom_call.1} parent=1 // pred_check
      %p284 = pneg %p25
    $region15: #{tpu_custom_call.1} parent=1 // pred_check_branch
      %286 = sbr.rel (%p284) target = $region17
    $region16: #{tpu_custom_call.1} parent=1 // pred_region
      %v287 = vld [vmem:[#allocation2] sm:$0xff]
      %v288 = vld [vmem:[#allocation2 + $0x8] sm:$0xff]
      %289 = vadd.xlane.f32.xlu0 %v287
      %v290 = vpop.xlane.xlu0 %289
      %291 = vadd.xlane.f32.xlu0 %v288
      %v292 = vpop.xlane.xlu0 %291
      %v293 = vmax.f32 %v290, 1.0
      %v294 = vmax.f32 %v292, 1.0
      %v295 = vrcp.pop %v293
      %v296 = vmul.f32 %v293, %v295
      %v297 = vsub.f32 1.0, %v296
      %v298 = vmul.f32 %v295, %v297
      %v299 = vadd.f32 %v295, %v298
      %vm300 = vweird.f32 %v293
      %vm301 = vweird.f32 %v295
      %vm302 = vmor %vm300, %vm301
      %v303 = vsel %vm302, %v295, %v299
      %v304 = vand.u32 2147483647, %v293
      %vm305 = vcmp.eq.f32.partialorder %v304, 8.507059e+37
      %v306 = vand.u32 %v293, 2147483648
      %v307 = vor.u32 1.1754944e-38, %v306
      %v308 = vsel %vm305, %v307, %v303
      %v309 = vmul.f32 1.0, %v308
      %v310 = vrcp.pop %v294
      %v311 = vmul.f32 %v294, %v310
      %v312 = vsub.f32 1.0, %v311
      %v313 = vmul.f32 %v310, %v312
      %v314 = vadd.f32 %v310, %v313
      %vm315 = vweird.f32 %v294
      %vm316 = vweird.f32 %v310
      %vm317 = vmor %vm315, %vm316
      %v318 = vsel %vm317, %v310, %v314
      %v319 = vand.u32 2147483647, %v294
      %vm320 = vcmp.eq.f32.partialorder %v319, 8.507059e+37
      %v321 = vand.u32 %v294, 2147483648
      %v322 = vor.u32 1.1754944e-38, %v321
      %v323 = vsel %vm320, %v322, %v318
      %v324 = vmul.f32 1.0, %v323
      %v325 = vmul.f32 %v287, %v309
      %v326 = vmul.f32 %v288, %v324
      %327 = vst [vmem:[#allocation6] sm:$0xff] %v325
      %328 = vst [vmem:[#allocation6 + $0x8] sm:$0xff] %v326
    $region17: #{tpu_custom_call.1} parent=1 // pred_fallthru
      _
    // Predicated region
    $region18: #{tpu_custom_call.1} parent=1 // pred_check
      _
    $region19: #{tpu_custom_call.1} parent=1 // pred_check_branch
      %330 = sbr.rel (0) target = $region21
    $region20: #{tpu_custom_call.1} parent=1 // pred_region
      %332 = vsyncadd [#allocation5], 0
      %s333 = sshll.u32 [#allocation6], 4
      %s334 = int_to_ptr.vmem [resolvable:$true] %s333
      %s335 = sshll.u32 %s1, 4
      %s336 = int_to_ptr.hbm [resolvable:$true] %s335
      %341 = dma.vmem_to_hbm [thread:$0]  %s334, 256, %s336, [#allocation5], 128, 128, 8
    $region21: #{tpu_custom_call.1} parent=1 // pred_fallthru
      _
    // Predicated region
    $region22: #{tpu_custom_call.1} parent=1 // pred_check
      _
    $region23: #{tpu_custom_call.1} parent=1 // pred_check_branch
      %343 = sbr.rel (0) target = $region25
    $region24: #{tpu_custom_call.1} parent=1 // pred_region
      %345 = dma.done [#allocation5], 256
    $region25: #{tpu_custom_call.1} parent=1 // pred_fallthru
      _
    %346 = vsyncpa [#allocation4], 1
    %347 = vsyncpa [#allocation5], 1

</llo_original>
